<compile_context>
chip_gen: v6e
topology: v6e:2x2x1
jax: 0.10.0
libtpu: 0.0.40
codegen_flags: <defaults>
</compile_context>

<pallas_src>
import jax
import jax.numpy as jnp
from jax.experimental import pallas as pl
from jax.experimental.pallas import tpu as pltpu


def _round_up(x, m):
    return ((x + m - 1) // m) * m


def hangman_rnn_kernel(x_ref, h0_ref, wih_ref, whh_ref, b_ref,
                       wfc_ref, bfc_ref, out_ref, hT_ref, pre_ref):
    """One batch tile: full-sequence tanh RNN + final Linear.

    x_ref   : (1, T*bt, Fp) f32   time-major rows for this batch tile
    h0_ref  : (bt, Hp)      f32
    wih_ref : (Fp, Hp)      f32   (= W_ih^T, zero-padded)
    whh_ref : (Hp, Hp)      f32   (= W_hh^T, zero-padded)
    b_ref   : (1, Hp)       f32   (= b_ih + b_hh, zero-padded)
    wfc_ref : (Hp, Op)      f32   (= W_fc^T, zero-padded)
    bfc_ref : (1, Op)       f32
    out_ref : (bt, Op)      f32
    hT_ref  : (bt, Hp)      f32
    pre_ref : (T*bt, Hp)    f32   VMEM scratch for the hoisted projection
    """
    _, TB, _ = x_ref.shape
    bt, _ = h0_ref.shape
    T = TB // bt

    # (1) Hoisted input projection: ONE matmul + bias for the whole tile,
    #     fully off the serial recurrence critical path.  Stored to a VMEM
    #     scratch so the recurrence reads tile-aligned slices and the live
    #     set stays flat in T.
    pre_ref[...] = (jnp.dot(x_ref[0], wih_ref[...],
                            preferred_element_type=jnp.float32)
                    + b_ref[...])

    whh = whh_ref[...]

    # (2) Independent batch sub-chains (when sublane-aligned) interleaved so
    #     the scheduler hides one chain's MXU drain / tanh latency under the
    #     other's work on this latency-bound recurrence.
    n_chains = 2 if (bt >= 16 and bt % 16 == 0) else 1
    rows = bt // n_chains
    starts = tuple(c * rows for c in range(n_chains))

    hs = [h0_ref[s:s + rows, :] for s in starts]

    if T <= 32:
        # Fully unrolled; every slice is static and sublane-aligned
        # (bt % 8 == 0, rows % 8 == 0), i.e. a free vreg view.
        for t in range(T):
            base = t * bt
            zs = [pre_ref[base + s:base + s + rows, :]
                  + jnp.dot(h, whh, preferred_element_type=jnp.float32)
                  for s, h in zip(starts, hs)]
            hs = [jnp.tanh(z) for z in zs]
    else:
        # Bounded-live-range loop for long sequences.
        def body(t, carry):
            zs = [pre_ref[pl.ds(pl.multiple_of(t * bt + s, 8), rows), :]
                  + jnp.dot(h, whh, preferred_element_type=jnp.float32)
                  for s, h in zip(starts, carry)]
            return tuple(jnp.tanh(z) for z in zs)
        hs = list(jax.lax.fori_loop(0, T, body, tuple(hs), unroll=4))

    # (3) Final hidden state + lane-dense logits (Op is a multiple of 128 ->
    #     unmasked stores).
    wfc = wfc_ref[...]
    bfc = bfc_ref[...]
    for s, h in zip(starts, hs):
        hT_ref[s:s + rows, :] = h
        out_ref[s:s + rows, :] = (
            jnp.dot(h, wfc, preferred_element_type=jnp.float32) + bfc)


def hangman_rnn_forward(x_btf, h0_1bh, params):
    """Wrapper matching HangmanRNN.forward(x, hidden).

    x_btf : (B, T, 27) float32   (PyTorch batch_first layout)
    h0_1bh: (1, B, H)  float32
    returns (out (B, 26), hidden (1, B, H))
    """
    B, T, F = x_btf.shape
    H = params["whh"].shape[0]
    O = params["wfc"].shape[1]

    Fp = _round_up(F, 8)      # 27 -> 32: aligned contraction rows for the MXU
    Hp = _round_up(H, 128)    # lane-dense hidden; zero-padded lanes stay 0
    Op = _round_up(O, 128)    # lane-dense logits -> unmasked output stores

    # Batch tile: multiple of 8 sublanes; for B > 8 force >= 2 tiles so the
    # "parallel" grid axis shards across both TensorCores on v7x.  Cap at 128
    # so the per-tile x slab / pre scratch fit v7x (64 MiB) and v5e budgets.
    if B <= 8:
        bt = 8
    else:
        bt = min(128, _round_up(-(-B // 2), 8))
    pad_b = (-B) % bt
    Bp = B + pad_b
    n_tiles = Bp // bt

    # Layout plumbing (XLA side): time-major, pad, then pack each batch
    # tile's timesteps into a contiguous (T*bt, Fp) slab so the kernel's
    # hoisted input projection is a single matmul.
    x_tbf = jnp.transpose(x_btf, (1, 0, 2))                       # (T, B, F)
    x_tbf = jnp.pad(x_tbf, ((0, 0), (0, pad_b), (0, Fp - F)))
    x_tiles = (x_tbf.reshape(T, n_tiles, bt, Fp)
                    .transpose(1, 0, 2, 3)
                    .reshape(n_tiles, T * bt, Fp))

    h0 = jnp.pad(h0_1bh[0], ((0, pad_b), (0, Hp - H)))

    # Zero-padded weights: padded rows/cols contribute exactly 0, so padded
    # hidden lanes stay exactly 0 through the tanh recurrence and the padded
    # logit lanes are sliced off below.
    wih = jnp.pad(params["wih"], ((0, Fp - F), (0, Hp - H)))
    whh = jnp.pad(params["whh"], ((0, Hp - H), (0, Hp - H)))
    bias = jnp.pad(params["b_ih"] + params["b_hh"], (0, Hp - H)).reshape(1, Hp)
    wfc = jnp.pad(params["wfc"], ((0, Hp - H), (0, Op - O)))
    bfc = jnp.pad(params["b_fc"], (0, Op - O)).reshape(1, Op)

    # VMEM budget (lane-padded, double-buffered) with headroom, clamped to
    # stay well inside v7x's 64 MiB physical VMEM (and v5e's 128 MiB).
    def vb(r, c):
        return _round_up(r, 8) * _round_up(c, 128) * 4
    est = (2 * vb(T * bt, Fp)                       # x slab (double-buffered)
           + vb(T * bt, Hp)                         # pre scratch
           + 2 * (vb(Fp, Hp) + vb(Hp, Hp) + vb(1, Hp) + vb(Hp, Op) + vb(1, Op))
           + 2 * (vb(bt, Op) + vb(bt, Hp))          # outputs
           + 2 * vb(bt, Hp))                        # h0 tile
    vmem_limit = int(min(max(2 * est, 32 * 1024 * 1024), 48 * 1024 * 1024))
    # TODO(synk): for very long sequences, chunk the hoisted projection over
    # time instead of raising vmem_limit further.

    full = lambda i: (0, 0)   # weights: constant block index -> VMEM-resident

    out_p, hT_p = pl.pallas_call(
        hangman_rnn_kernel,
        out_shape=(
            jax.ShapeDtypeStruct((Bp, Op), jnp.float32),
            jax.ShapeDtypeStruct((Bp, Hp), jnp.float32),
        ),
        grid=(n_tiles,),
        in_specs=[
            pl.BlockSpec((1, T * bt, Fp), lambda i: (i, 0, 0)),   # x slab
            pl.BlockSpec((bt, Hp), lambda i: (i, 0)),             # h0 tile
            pl.BlockSpec((Fp, Hp), full),                         # W_ih
            pl.BlockSpec((Hp, Hp), full),                         # W_hh
            pl.BlockSpec((1, Hp), full),                          # bias
            pl.BlockSpec((Hp, Op), full),                         # W_fc
            pl.BlockSpec((1, Op), full),                          # b_fc
        ],
        out_specs=(
            pl.BlockSpec((bt, Op), lambda i: (i, 0)),
            pl.BlockSpec((bt, Hp), lambda i: (i, 0)),
        ),
        scratch_shapes=[pltpu.VMEM((T * bt, Hp), jnp.float32)],
        compiler_params=pltpu.CompilerParams(
            dimension_semantics=("parallel",),        # megacore / 2 TCs (v7x)
            vmem_limit_bytes=vmem_limit),
    )(x_tiles, h0, wih, whh, bias, wfc, bfc)

    out = out_p[:B, :O]
    hT = hT_p[:B, :H]
    return out, hT[None, :, :]                        # hidden back to (1, B, H)


def init_params(key, hidden_size=32, input_size=27, out_size=26):
    """Deterministic init (PyTorch-style uniform(-1/sqrt(H), 1/sqrt(H)))."""
    k = jax.random.split(key, 6)
    s = 1.0 / jnp.sqrt(hidden_size)
    return {
        # stored pre-transposed for activations @ W
        "wih": jax.random.uniform(k[0], (input_size, hidden_size), jnp.float32, -s, s),
        "whh": jax.random.uniform(k[1], (hidden_size, hidden_size), jnp.float32, -s, s),
        "b_ih": jax.random.uniform(k[2], (hidden_size,), jnp.float32, -s, s),
        "b_hh": jax.random.uniform(k[3], (hidden_size,), jnp.float32, -s, s),
        "wfc": jax.random.uniform(k[4], (hidden_size, out_size), jnp.float32, -s, s),
        "b_fc": jax.random.uniform(k[5], (out_size,), jnp.float32, -s, s),
    }


def reference_forward(x_btf, h0_1bh, params):
    """Pure-JAX reference of the PyTorch forward."""
    B, T, F = x_btf.shape
    h = h0_1bh[0]
    bias = params["b_ih"] + params["b_hh"]
    for t in range(T):
        h = jnp.tanh(x_btf[:, t, :] @ params["wih"] + h @ params["whh"] + bias)
    out = h @ params["wfc"] + params["b_fc"]
    return out, h[None, :, :]


if __name__ == "__main__":
    key = jax.random.PRNGKey(0)
    k_param, k_x1, k_x2 = jax.random.split(key, 3)

    batch, seq, input_size, hidden_size = 2, 8, 27, 32
    params = init_params(k_param, hidden_size=hidden_size, input_size=input_size)

    # Small case (single tile, single chain).
    x = jax.random.uniform(k_x1, (batch, seq, input_size), jnp.float32)
    h0 = jnp.zeros((1, batch, hidden_size), jnp.float32)   # init_hidden
    out, hidden = hangman_rnn_forward(x, h0, params)
    out = jax.block_until_ready(out)
    hidden = jax.block_until_ready(hidden)
    ref_out, ref_hidden = reference_forward(x, h0, params)
    assert out.shape == (batch, 26)
    assert hidden.shape == (1, batch, hidden_size)
    assert jnp.allclose(out, ref_out, atol=1e-5, rtol=1e-5)
    assert jnp.allclose(hidden, ref_hidden, atol=1e-5, rtol=1e-5)

    # Larger batch: exercises >=2 grid tiles (megacore path) and the
    # interleaved two-sub-chain recurrence.
    batch2 = 64
    x2 = jax.random.uniform(k_x2, (batch2, seq, input_size), jnp.float32)
    h02 = jnp.zeros((1, batch2, hidden_size), jnp.float32)
    out2, hidden2 = hangman_rnn_forward(x2, h02, params)
    out2 = jax.block_until_ready(out2)
    hidden2 = jax.block_until_ready(hidden2)
    ref_out2, ref_hidden2 = reference_forward(x2, h02, params)
    assert out2.shape == (batch2, 26)
    assert hidden2.shape == (1, batch2, hidden_size)
    assert jnp.allclose(out2, ref_out2, atol=1e-5, rtol=1e-5)
    assert jnp.allclose(hidden2, ref_hidden2, atol=1e-5, rtol=1e-5)

    print("KERNEL_OK")
</pallas_src>

<mosaic_0001>
module attributes {stable_mosaic.version = 11 : i64} {
  func.func @hangman_rnn_kernel(%arg0: i32, %arg1: memref<1x64x32xf32, #tpu.memory_space<vmem>>, %arg2: memref<8x128xf32, #tpu.memory_space<vmem>>, %arg3: memref<32x128xf32, #tpu.memory_space<vmem>>, %arg4: memref<128x128xf32, #tpu.memory_space<vmem>>, %arg5: memref<1x128xf32, #tpu.memory_space<vmem>>, %arg6: memref<128x128xf32, #tpu.memory_space<vmem>>, %arg7: memref<1x128xf32, #tpu.memory_space<vmem>>, %arg8: memref<8x128xf32, #tpu.memory_space<vmem>>, %arg9: memref<8x128xf32, #tpu.memory_space<vmem>>, %arg10: memref<64x128xf32, #tpu.memory_space<vmem>>) attributes {dimension_semantics = [#tpu.dimension_semantics<parallel>], iteration_bounds = array<i64: 1>, scalar_prefetch = 0 : i64, scratch_operands = 1 : i64, tpu.core_type = #tpu.core_type<tc>, window_params = [{transform_indices = @transform_0, window_bounds = array<i64: 1, 64, 32>}, {transform_indices = @transform_1, window_bounds = array<i64: 8, 128>}, {pipeline_mode = #tpu.pipeline_mode<synchronous>, transform_indices = @transform_2, window_bounds = array<i64: 32, 128>}, {pipeline_mode = #tpu.pipeline_mode<synchronous>, transform_indices = @transform_3, window_bounds = array<i64: 128, 128>}, {pipeline_mode = #tpu.pipeline_mode<synchronous>, transform_indices = @transform_4, window_bounds = array<i64: 1, 128>}, {pipeline_mode = #tpu.pipeline_mode<synchronous>, transform_indices = @transform_5, window_bounds = array<i64: 128, 128>}, {pipeline_mode = #tpu.pipeline_mode<synchronous>, transform_indices = @transform_6, window_bounds = array<i64: 1, 128>}, {transform_indices = @transform_7, window_bounds = array<i64: 8, 128>}, {transform_indices = @transform_8, window_bounds = array<i64: 8, 128>}]} {
    %c0 = arith.constant 0 : index
    %c0_0 = arith.constant 0 : index
    %c0_1 = arith.constant 0 : index
    %0 = vector.load %arg1[%c0, %c0_0, %c0_1] : memref<1x64x32xf32, #tpu.memory_space<vmem>>, vector<1x64x32xf32>
    %1 = vector.shape_cast %0 : vector<1x64x32xf32> to vector<64x32xf32>
    %c0_2 = arith.constant 0 : index
    %c0_3 = arith.constant 0 : index
    %2 = vector.load %arg3[%c0_2, %c0_3] : memref<32x128xf32, #tpu.memory_space<vmem>>, vector<32x128xf32>
    %cst = arith.constant dense<0.000000e+00> : vector<64x128xf32>
    %3 = tpu.matmul %1, %2, %cst {dimension_numbers = #tpu.dot_dimension_numbers<[1], [0], [0], [1], [0, 0, 1, 1], [], []>} : vector<64x32xf32>, vector<32x128xf32>, vector<64x128xf32> -> vector<64x128xf32>
    %c0_4 = arith.constant 0 : index
    %c0_5 = arith.constant 0 : index
    %4 = vector.load %arg5[%c0_4, %c0_5] : memref<1x128xf32, #tpu.memory_space<vmem>>, vector<1x128xf32>
    %5 = vector.broadcast %4 : vector<1x128xf32> to vector<64x128xf32>
    %6 = arith.addf %3, %5 : vector<64x128xf32>
    %c0_6 = arith.constant 0 : index
    %c0_7 = arith.constant 0 : index
    %7 = vector.load %arg10[%c0_6, %c0_7] : memref<64x128xf32, #tpu.memory_space<vmem>>, vector<64x128xf32>
    tpu.vector_store %arg10[%c0_6, %c0_7], %6 {strides = array<i32>} : memref<64x128xf32, #tpu.memory_space<vmem>>, vector<64x128xf32>,
    %c0_8 = arith.constant 0 : index
    %c0_9 = arith.constant 0 : index
    %8 = vector.load %arg4[%c0_8, %c0_9] : memref<128x128xf32, #tpu.memory_space<vmem>>, vector<128x128xf32>
    %c0_10 = arith.constant 0 : index
    %c0_11 = arith.constant 0 : index
    %9 = vector.load %arg2[%c0_10, %c0_11] : memref<8x128xf32, #tpu.memory_space<vmem>>, vector<8x128xf32>
    %c0_12 = arith.constant 0 : index
    %c0_13 = arith.constant 0 : index
    %10 = vector.load %arg10[%c0_12, %c0_13] : memref<64x128xf32, #tpu.memory_space<vmem>>, vector<8x128xf32>
    %cst_14 = arith.constant dense<0.000000e+00> : vector<8x128xf32>
    %11 = tpu.matmul %9, %8, %cst_14 {dimension_numbers = #tpu.dot_dimension_numbers<[1], [0], [0], [1], [0, 0, 1, 1], [], []>} : vector<8x128xf32>, vector<128x128xf32>, vector<8x128xf32> -> vector<8x128xf32>
    %12 = arith.addf %10, %11 : vector<8x128xf32>
    %13 = math.tanh %12 : vector<8x128xf32>
    %c8 = arith.constant 8 : index
    %c0_15 = arith.constant 0 : index
    %14 = vector.load %arg10[%c8, %c0_15] : memref<64x128xf32, #tpu.memory_space<vmem>>, vector<8x128xf32>
    %cst_16 = arith.constant dense<0.000000e+00> : vector<8x128xf32>
    %15 = tpu.matmul %13, %8, %cst_16 {dimension_numbers = #tpu.dot_dimension_numbers<[1], [0], [0], [1], [0, 0, 1, 1], [], []>} : vector<8x128xf32>, vector<128x128xf32>, vector<8x128xf32> -> vector<8x128xf32>
    %16 = arith.addf %14, %15 : vector<8x128xf32>
    %17 = math.tanh %16 : vector<8x128xf32>
    %c16 = arith.constant 16 : index
    %c0_17 = arith.constant 0 : index
    %18 = vector.load %arg10[%c16, %c0_17] : memref<64x128xf32, #tpu.memory_space<vmem>>, vector<8x128xf32>
    %cst_18 = arith.constant dense<0.000000e+00> : vector<8x128xf32>
    %19 = tpu.matmul %17, %8, %cst_18 {dimension_numbers = #tpu.dot_dimension_numbers<[1], [0], [0], [1], [0, 0, 1, 1], [], []>} : vector<8x128xf32>, vector<128x128xf32>, vector<8x128xf32> -> vector<8x128xf32>
    %20 = arith.addf %18, %19 : vector<8x128xf32>
    %21 = math.tanh %20 : vector<8x128xf32>
    %c24 = arith.constant 24 : index
    %c0_19 = arith.constant 0 : index
    %22 = vector.load %arg10[%c24, %c0_19] : memref<64x128xf32, #tpu.memory_space<vmem>>, vector<8x128xf32>
    %cst_20 = arith.constant dense<0.000000e+00> : vector<8x128xf32>
    %23 = tpu.matmul %21, %8, %cst_20 {dimension_numbers = #tpu.dot_dimension_numbers<[1], [0], [0], [1], [0, 0, 1, 1], [], []>} : vector<8x128xf32>, vector<128x128xf32>, vector<8x128xf32> -> vector<8x128xf32>
    %24 = arith.addf %22, %23 : vector<8x128xf32>
    %25 = math.tanh %24 : vector<8x128xf32>
    %c32 = arith.constant 32 : index
    %c0_21 = arith.constant 0 : index
    %26 = vector.load %arg10[%c32, %c0_21] : memref<64x128xf32, #tpu.memory_space<vmem>>, vector<8x128xf32>
    %cst_22 = arith.constant dense<0.000000e+00> : vector<8x128xf32>
    %27 = tpu.matmul %25, %8, %cst_22 {dimension_numbers = #tpu.dot_dimension_numbers<[1], [0], [0], [1], [0, 0, 1, 1], [], []>} : vector<8x128xf32>, vector<128x128xf32>, vector<8x128xf32> -> vector<8x128xf32>
    %28 = arith.addf %26, %27 : vector<8x128xf32>
    %29 = math.tanh %28 : vector<8x128xf32>
    %c40 = arith.constant 40 : index
    %c0_23 = arith.constant 0 : index
    %30 = vector.load %arg10[%c40, %c0_23] : memref<64x128xf32, #tpu.memory_space<vmem>>, vector<8x128xf32>
    %cst_24 = arith.constant dense<0.000000e+00> : vector<8x128xf32>
    %31 = tpu.matmul %29, %8, %cst_24 {dimension_numbers = #tpu.dot_dimension_numbers<[1], [0], [0], [1], [0, 0, 1, 1], [], []>} : vector<8x128xf32>, vector<128x128xf32>, vector<8x128xf32> -> vector<8x128xf32>
    %32 = arith.addf %30, %31 : vector<8x128xf32>
    %33 = math.tanh %32 : vector<8x128xf32>
    %c48 = arith.constant 48 : index
    %c0_25 = arith.constant 0 : index
    %34 = vector.load %arg10[%c48, %c0_25] : memref<64x128xf32, #tpu.memory_space<vmem>>, vector<8x128xf32>
    %cst_26 = arith.constant dense<0.000000e+00> : vector<8x128xf32>
    %35 = tpu.matmul %33, %8, %cst_26 {dimension_numbers = #tpu.dot_dimension_numbers<[1], [0], [0], [1], [0, 0, 1, 1], [], []>} : vector<8x128xf32>, vector<128x128xf32>, vector<8x128xf32> -> vector<8x128xf32>
    %36 = arith.addf %34, %35 : vector<8x128xf32>
    %37 = math.tanh %36 : vector<8x128xf32>
    %c56 = arith.constant 56 : index
    %c0_27 = arith.constant 0 : index
    %38 = vector.load %arg10[%c56, %c0_27] : memref<64x128xf32, #tpu.memory_space<vmem>>, vector<8x128xf32>
    %cst_28 = arith.constant dense<0.000000e+00> : vector<8x128xf32>
    %39 = tpu.matmul %37, %8, %cst_28 {dimension_numbers = #tpu.dot_dimension_numbers<[1], [0], [0], [1], [0, 0, 1, 1], [], []>} : vector<8x128xf32>, vector<128x128xf32>, vector<8x128xf32> -> vector<8x128xf32>
    %40 = arith.addf %38, %39 : vector<8x128xf32>
    %41 = math.tanh %40 : vector<8x128xf32>
    %c0_29 = arith.constant 0 : index
    %c0_30 = arith.constant 0 : index
    %42 = vector.load %arg6[%c0_29, %c0_30] : memref<128x128xf32, #tpu.memory_space<vmem>>, vector<128x128xf32>
    %c0_31 = arith.constant 0 : index
    %c0_32 = arith.constant 0 : index
    %43 = vector.load %arg7[%c0_31, %c0_32] : memref<1x128xf32, #tpu.memory_space<vmem>>, vector<1x128xf32>
    %c0_33 = arith.constant 0 : index
    %c0_34 = arith.constant 0 : index
    %44 = vector.load %arg9[%c0_33, %c0_34] : memref<8x128xf32, #tpu.memory_space<vmem>>, vector<8x128xf32>
    tpu.vector_store %arg9[%c0_33, %c0_34], %41 {strides = array<i32>} : memref<8x128xf32, #tpu.memory_space<vmem>>, vector<8x128xf32>,
    %cst_35 = arith.constant dense<0.000000e+00> : vector<8x128xf32>
    %45 = tpu.matmul %41, %42, %cst_35 {dimension_numbers = #tpu.dot_dimension_numbers<[1], [0], [0], [1], [0, 0, 1, 1], [], []>} : vector<8x128xf32>, vector<128x128xf32>, vector<8x128xf32> -> vector<8x128xf32>
    %46 = vector.broadcast %43 : vector<1x128xf32> to vector<8x128xf32>
    %47 = arith.addf %45, %46 : vector<8x128xf32>
    %c0_36 = arith.constant 0 : index
    %c0_37 = arith.constant 0 : index
    %48 = vector.load %arg8[%c0_36, %c0_37] : memref<8x128xf32, #tpu.memory_space<vmem>>, vector<8x128xf32>
    tpu.vector_store %arg8[%c0_36, %c0_37], %47 {strides = array<i32>} : memref<8x128xf32, #tpu.memory_space<vmem>>, vector<8x128xf32>,
    return
  }
  func.func @transform_0(%arg0: i32) -> (i32, i32, i32) {
    %c0_i32 = arith.constant 0 : i32
    %c0_i32_0 = arith.constant 0 : i32
    %c0_i32_1 = arith.constant 0 : i32
    return %arg0, %c0_i32, %c0_i32_0 : i32, i32, i32
  }
  func.func @transform_1(%arg0: i32) -> (i32, i32) {
    %c0_i32 = arith.constant 0 : i32
    %c0_i32_0 = arith.constant 0 : i32
    return %arg0, %c0_i32 : i32, i32
  }
  func.func @transform_2(%arg0: i32) -> (i32, i32) {
    %c0_i32 = arith.constant 0 : i32
    %c0_i32_0 = arith.constant 0 : i32
    %c0_i32_1 = arith.constant 0 : i32
    return %c0_i32, %c0_i32_0 : i32, i32
  }
  func.func @transform_3(%arg0: i32) -> (i32, i32) {
    %c0_i32 = arith.constant 0 : i32
    %c0_i32_0 = arith.constant 0 : i32
    %c0_i32_1 = arith.constant 0 : i32
    return %c0_i32, %c0_i32_0 : i32, i32
  }
  func.func @transform_4(%arg0: i32) -> (i32, i32) {
    %c0_i32 = arith.constant 0 : i32
    %c0_i32_0 = arith.constant 0 : i32
    %c0_i32_1 = arith.constant 0 : i32
    return %c0_i32, %c0_i32_0 : i32, i32
  }
  func.func @transform_5(%arg0: i32) -> (i32, i32) {
    %c0_i32 = arith.constant 0 : i32
    %c0_i32_0 = arith.constant 0 : i32
    %c0_i32_1 = arith.constant 0 : i32
    return %c0_i32, %c0_i32_0 : i32, i32
  }
  func.func @transform_6(%arg0: i32) -> (i32, i32) {
    %c0_i32 = arith.constant 0 : i32
    %c0_i32_0 = arith.constant 0 : i32
    %c0_i32_1 = arith.constant 0 : i32
    return %c0_i32, %c0_i32_0 : i32, i32
  }
  func.func @transform_7(%arg0: i32) -> (i32, i32) {
    %c0_i32 = arith.constant 0 : i32
    %c0_i32_0 = arith.constant 0 : i32
    return %arg0, %c0_i32 : i32, i32
  }
  func.func @transform_8(%arg0: i32) -> (i32, i32) {
    %c0_i32 = arith.constant 0 : i32
    %c0_i32_0 = arith.constant 0 : i32
    return %arg0, %c0_i32 : i32, i32
  }
}

</mosaic_0001>

<llo_original>
// kernel: tpu_custom_call.1
$region0: #{tpu_custom_call.1}
  #allocation0 [shape = 'u32[]', space=smem, size = 0x4, offset = 0x4, fixed_abs, tag = 'smem constant byte address 0x4 - core index']
  #allocation1 [shape = 'u32[144,128]{1,0:T(1,128)}', space=vmem, size = 0x12000, scoped, tag = 'internal scratch']
  #allocation2 [shape = 'f32[64,128]{1,0:T(8,128)}', space=vmem, size = 0x8000, scoped, tag = 'scratch operand']
  %s0 = inlined_call_operand.vmem [shape: f32[1,64,32], index: 0, kind: input, shape index: {}]
  %s1 = inlined_call_operand.vmem [shape: f32[8,128], index: 1, kind: input, shape index: {}]
  %s2 = inlined_call_operand.vmem [shape: f32[32,128], index: 2, kind: input, shape index: {}]
  %s3 = inlined_call_operand.hbm [shape: f32[128,128], index: 3, kind: input, shape index: {}]
  %s4 = inlined_call_operand.vmem [shape: f32[1,128], index: 4, kind: input, shape index: {}]
  %s5 = inlined_call_operand.hbm [shape: f32[128,128], index: 5, kind: input, shape index: {}]
  %s6 = inlined_call_operand.vmem [shape: f32[1,128], index: 6, kind: input, shape index: {}]
  %s7 = inlined_call_operand.hbm [shape: f32[8,128], index: 7, kind: output, shape index: {0}]
  %s8 = inlined_call_operand.hbm [shape: f32[8,128], index: 8, kind: output, shape index: {1}]
  %9 = xla_tuple %s7, %s8
  %s10 = sld [smem:[#allocation0]]
  $region54: #{tpu_custom_call.1} parent=0
    _
  %s12 = ssub.s32 1, %s10
  %s13 = scalar_select 0, %s12, %s10
  $region1: #{tpu_custom_call.1} parent=0
    #allocation3 [shape = 'u8[65536]{0}', space=vmem, size = 0x10000, scoped, tag = 'input window, operand 3, single buffered']
    #allocation4 [shape = 's32[1]{0}', space=sflag, size = 0x4, scoped, tag = 'scoped memory for tpu_custom_call.1']
    #allocation5 [shape = 's32[1]{0}', space=sflag, size = 0x4, scoped, tag = 'scoped memory for tpu_custom_call.1']
    #allocation6 [shape = 'u8[65536]{0}', space=vmem, size = 0x10000, scoped, tag = 'input window, operand 5, single buffered']
    #allocation7 [shape = 's32[1]{0}', space=sflag, size = 0x4, scoped, tag = 'scoped memory for tpu_custom_call.1']
    #allocation8 [shape = 'u8[4096]{0}', space=vmem, size = 0x1000, scoped, tag = 'output window, operand 0, single buffered']
    #allocation9 [shape = 'u8[4096]{0}', space=vmem, size = 0x1000, scoped, tag = 'output window, operand 1, single buffered']
    #allocation10 [shape = 's32[1]{0}', space=sflag, size = 0x4, scoped, tag = 'scoped memory for tpu_custom_call.1']
    %14 = vsyncpa [#allocation4], 0
    %15 = vsyncpa [#allocation7], 0
    %16 = vsyncpa [#allocation5], 0
    %17 = vsyncpa [#allocation10], 0
    // Predicated region
    $region2: #{tpu_custom_call.1} parent=1 // pred_check
      _
    $region3: #{tpu_custom_call.1} parent=1 // pred_check_branch
      %19 = sbr.rel (0) target = $region5
    $region4: #{tpu_custom_call.1} parent=1 // pred_region
      _
    $region5: #{tpu_custom_call.1} parent=1 // pred_fallthru
      _
    // Predicated region
    $region6: #{tpu_custom_call.1} parent=1 // pred_check
      _
    $region7: #{tpu_custom_call.1} parent=1 // pred_check_branch
      %21 = sbr.rel (0) target = $region9
    $region8: #{tpu_custom_call.1} parent=1 // pred_region
      _
    $region9: #{tpu_custom_call.1} parent=1 // pred_fallthru
      _
    // Predicated region
    $region10: #{tpu_custom_call.1} parent=1 // pred_check
      _
    $region11: #{tpu_custom_call.1} parent=1 // pred_check_branch
      %23 = sbr.rel (0) target = $region13
    $region12: #{tpu_custom_call.1} parent=1 // pred_region
      _
    $region13: #{tpu_custom_call.1} parent=1 // pred_fallthru
      _
    // Predicated region
    $region14: #{tpu_custom_call.1} parent=1 // pred_check
      _
    $region15: #{tpu_custom_call.1} parent=1 // pred_check_branch
      %25 = sbr.rel (0) target = $region17
    $region16: #{tpu_custom_call.1} parent=1 // pred_region
      %s27 = ssub.s32 2048, 2048
      %28 = vsyncadd [#allocation4], %s27
      %s29 = sshll.u32 [#allocation3], 4
      %s30 = int_to_ptr.vmem [resolvable:$true] %s29
      %35 = dma.hbm_to_vmem [thread:$0]  %s3, 2048, %s30, [#allocation4], 128, 128, 8
    $region17: #{tpu_custom_call.1} parent=1 // pred_fallthru
      _
    // Predicated region
    $region18: #{tpu_custom_call.1} parent=1 // pred_check
      _
    $region19: #{tpu_custom_call.1} parent=1 // pred_check_branch
      %37 = sbr.rel (0) target = $region21
    $region20: #{tpu_custom_call.1} parent=1 // pred_region
      _
    $region21: #{tpu_custom_call.1} parent=1 // pred_fallthru
      _
    // Predicated region
    $region22: #{tpu_custom_call.1} parent=1 // pred_check
      _
    $region23: #{tpu_custom_call.1} parent=1 // pred_check_branch
      %39 = sbr.rel (0) target = $region25
    $region24: #{tpu_custom_call.1} parent=1 // pred_region
      %s41 = ssub.s32 2048, 2048
      %42 = vsyncadd [#allocation7], %s41
      %s43 = sshll.u32 [#allocation6], 4
      %s44 = int_to_ptr.vmem [resolvable:$true] %s43
      %49 = dma.hbm_to_vmem [thread:$0]  %s5, 2048, %s44, [#allocation7], 128, 128, 8
    $region25: #{tpu_custom_call.1} parent=1 // pred_fallthru
      _
    // Predicated region
    $region26: #{tpu_custom_call.1} parent=1 // pred_check
      _
    $region27: #{tpu_custom_call.1} parent=1 // pred_check_branch
      %51 = sbr.rel (0) target = $region29
    $region28: #{tpu_custom_call.1} parent=1 // pred_region
      _
    $region29: #{tpu_custom_call.1} parent=1 // pred_fallthru
      _
    // Predicated region
    $region30: #{tpu_custom_call.1} parent=1 // pred_check
      _
    $region31: #{tpu_custom_call.1} parent=1 // pred_check_branch
      %53 = sbr.rel (0) target = $region33
    $region32: #{tpu_custom_call.1} parent=1 // pred_region
      %54 = dma.done [#allocation4], 2048
    $region33: #{tpu_custom_call.1} parent=1 // pred_fallthru
      _
    // Predicated region
    $region34: #{tpu_custom_call.1} parent=1 // pred_check
      _
    $region35: #{tpu_custom_call.1} parent=1 // pred_check_branch
      %56 = sbr.rel (0) target = $region37
    $region36: #{tpu_custom_call.1} parent=1 // pred_region
      %57 = dma.done [#allocation7], 2048
    $region37: #{tpu_custom_call.1} parent=1 // pred_fallthru
      _
    %v58 = vld [vmem:[%s0] sm:$0xff]
    %v59 = vld [vmem:[%s0 + $0x8] sm:$0xff]
    %v60 = vld [vmem:[%s0 + $0x10] sm:$0xff]
    %v61 = vld [vmem:[%s0 + $0x18] sm:$0xff]
    %v62 = vld [vmem:[%s0 + $0x20] sm:$0xff]
    %v63 = vld [vmem:[%s0 + $0x28] sm:$0xff]
    %v64 = vld [vmem:[%s0 + $0x30] sm:$0xff]
    %v65 = vld [vmem:[%s0 + $0x38] sm:$0xff]
    %v66 = vld [vmem:[%s2] sm:$0xff]
    %v67 = vld [vmem:[%s2 + $0x8] sm:$0xff]
    %v68 = vld [vmem:[%s2 + $0x10] sm:$0xff]
    %v69 = vld [vmem:[%s2 + $0x18] sm:$0xff]
    %v70 = vld [vmem:[%s4] sm:$0x1]
    %v72 = vlaneseq
    %v73 = vshrl.u32 %v72, 7
    %v74 = vsub.s32 0, %v73
    %v75 = vrot.slane %v70, %v74
    %vm77 = vcmask 261120
    %v79 = vsel %vm77, %v58, 0
    %v82 = vsel %vm77, %v59, 0
    %v85 = vsel %vm77, %v60, 0
    %v88 = vsel %vm77, %v61, 0
    %v91 = vsel %vm77, %v62, 0
    %v94 = vsel %vm77, %v63, 0
    %v97 = vsel %vm77, %v64, 0
    %v100 = vsel %vm77, %v65, 0
    %102 = vmatprep.subr.mxu0 0.0
    %103 = vmatpush1.msra.mxu0 0.0
    %104 = vmatprep.subr.mxu0 0.0
    %105 = vmatpush1.msra.mxu0 0.0
    %106 = vmatprep.subr.mxu0 0.0
    %107 = vmatpush1.msra.mxu0 0.0
    %108 = vmatprep.subr.mxu0 0.0
    %109 = vmatpush1.msra.mxu0 0.0
    %110 = vmatprep.subr.mxu0 0.0
    %111 = vmatpush1.msra.mxu0 0.0
    %112 = vmatprep.subr.mxu0 0.0
    %113 = vmatpush1.msra.mxu0 0.0
    %114 = vmatprep.subr.mxu0 0.0
    %115 = vmatpush1.msra.mxu0 0.0
    %116 = vmatprep.subr.mxu0 0.0
    %117 = vmatpush1.msra.mxu0 0.0
    %118 = vmatprep.subr.mxu0 0.0
    %119 = vmatpush1.msra.mxu0 0.0
    %120 = vmatprep.subr.mxu0 0.0
    %121 = vmatpush1.msra.mxu0 0.0
    %122 = vmatprep.subr.mxu0 0.0
    %123 = vmatpush1.msra.mxu0 0.0
    %124 = vmatprep.subr.mxu0 0.0
    %125 = vmatpush1.msra.mxu0 0.0
    %126 = vmatprep.subr.mxu0 0.0
    %127 = vmatpush1.msra.mxu0 %v69
    %128 = vmatprep.subr.mxu0 0.0
    %129 = vmatpush1.msra.mxu0 %v68
    %130 = vmatprep.subr.mxu0 0.0
    %131 = vmatpush1.msra.mxu0 %v67
    %132 = vmatprep.subr.mxu0 0.0
    %133 = vmatpush1.msra.mxu0 %v66
    %134 = vmatprep.subr.mxu0 0.0
    %135 = vmatpush2.msra.mxu0 0.0
    %136 = vmatprep.subr.mxu0 0.0
    %137 = vmatpush2.msra.mxu0 0.0
    %138 = vmatprep.subr.mxu0 0.0
    %139 = vmatpush2.msra.mxu0 0.0
    %140 = vmatprep.subr.mxu0 0.0
    %141 = vmatpush2.msra.mxu0 0.0
    %142 = vmatprep.subr.mxu0 0.0
    %143 = vmatpush2.msra.mxu0 0.0
    %144 = vmatprep.subr.mxu0 0.0
    %145 = vmatpush2.msra.mxu0 0.0
    %146 = vmatprep.subr.mxu0 0.0
    %147 = vmatpush2.msra.mxu0 0.0
    %148 = vmatprep.subr.mxu0 0.0
    %149 = vmatpush2.msra.mxu0 0.0
    %150 = vmatprep.subr.mxu0 0.0
    %151 = vmatpush2.msra.mxu0 0.0
    %152 = vmatprep.subr.mxu0 0.0
    %153 = vmatpush2.msra.mxu0 0.0
    %154 = vmatprep.subr.mxu0 0.0
    %155 = vmatpush2.msra.mxu0 0.0
    %156 = vmatprep.subr.mxu0 0.0
    %157 = vmatpush2.msra.mxu0 0.0
    %158 = vmatprep.subr.mxu0 0.0
    %159 = vmatpush2.msra.mxu0 0.0
    %160 = vmatprep.subr.mxu0 0.0
    %161 = vmatpush2.msra.mxu0 0.0
    %162 = vmatprep.subr.mxu0 0.0
    %163 = vmatpush2.msra.mxu0 0.0
    %164 = vmatprep.subr.mxu0 0.0
    %165 = vmatpush2.msra.mxu0 0.0
    %166 = vmatprep.mubr.f32.mxu0 0.0
    %167 = vmatmul.mubr.f32.gmra.mxu0 %v79
    %v168 = vpop.f32.mrf.mxu0
    %v169 = vadd.f32 %v75, %v168
    %v170 = vpop.f32.mrf.mxu0
    %171 = vmatprep.mubr.f32.mxu0 0.0
    %172 = vmatmul.mubr.f32.gmra.mxu0 %v82
    %v173 = vpop.f32.mrf.mxu0
    %v174 = vadd.f32 %v75, %v173
    %v175 = vpop.f32.mrf.mxu0
    %176 = vmatprep.mubr.f32.mxu0 0.0
    %177 = vmatmul.mubr.f32.gmra.mxu0 %v85
    %v178 = vpop.f32.mrf.mxu0
    %v179 = vadd.f32 %v75, %v178
    %v180 = vpop.f32.mrf.mxu0
    %181 = vmatprep.mubr.f32.mxu0 0.0
    %182 = vmatmul.mubr.f32.gmra.mxu0 %v88
    %v183 = vpop.f32.mrf.mxu0
    %v184 = vadd.f32 %v75, %v183
    %v185 = vpop.f32.mrf.mxu0
    %186 = vmatprep.mubr.f32.mxu0 0.0
    %187 = vmatmul.mubr.f32.gmra.mxu0 %v91
    %v188 = vpop.f32.mrf.mxu0
    %v189 = vadd.f32 %v75, %v188
    %v190 = vpop.f32.mrf.mxu0
    %191 = vmatprep.mubr.f32.mxu0 0.0
    %192 = vmatmul.mubr.f32.gmra.mxu0 %v94
    %v193 = vpop.f32.mrf.mxu0
    %v194 = vadd.f32 %v75, %v193
    %v195 = vpop.f32.mrf.mxu0
    %196 = vmatprep.mubr.f32.mxu0 0.0
    %197 = vmatmul.mubr.f32.gmra.mxu0 %v97
    %v198 = vpop.f32.mrf.mxu0
    %v199 = vadd.f32 %v75, %v198
    %v200 = vpop.f32.mrf.mxu0
    %201 = vmatprep.mubr.f32.mxu0 0.0
    %202 = vmatmul.mubr.f32.gmra.mxu0 %v100
    %v203 = vpop.f32.mrf.mxu0
    %v204 = vadd.f32 %v75, %v203
    %v205 = vpop.f32.mrf.mxu0
    %206 = vdwg.mxu0
    %207 = vst [vmem:[#allocation2] sm:$0xff] %v169
    %208 = vst [vmem:[#allocation2 + $0x8] sm:$0xff] %v174
    %209 = vst [vmem:[#allocation2 + $0x10] sm:$0xff] %v179
    %210 = vst [vmem:[#allocation2 + $0x18] sm:$0xff] %v184
    %211 = vst [vmem:[#allocation2 + $0x20] sm:$0xff] %v189
    %212 = vst [vmem:[#allocation2 + $0x28] sm:$0xff] %v194
    %213 = vst [vmem:[#allocation2 + $0x30] sm:$0xff] %v199
    %214 = vst [vmem:[#allocation2 + $0x38] sm:$0xff] %v204
    %v215 = vld [vmem:[#allocation3] sm:$0xff]
    %v216 = vld [vmem:[#allocation3 + $0x8] sm:$0xff]
    %v217 = vld [vmem:[#allocation3 + $0x10] sm:$0xff]
    %v218 = vld [vmem:[#allocation3 + $0x18] sm:$0xff]
    %v219 = vld [vmem:[#allocation3 + $0x20] sm:$0xff]
    %v220 = vld [vmem:[#allocation3 + $0x28] sm:$0xff]
    %v221 = vld [vmem:[#allocation3 + $0x30] sm:$0xff]
    %v222 = vld [vmem:[#allocation3 + $0x38] sm:$0xff]
    %v223 = vld [vmem:[#allocation3 + $0x40] sm:$0xff]
    %v224 = vld [vmem:[#allocation3 + $0x48] sm:$0xff]
    %v225 = vld [vmem:[#allocation3 + $0x50] sm:$0xff]
    %v226 = vld [vmem:[#allocation3 + $0x58] sm:$0xff]
    %v227 = vld [vmem:[#allocation3 + $0x60] sm:$0xff]
    %v228 = vld [vmem:[#allocation3 + $0x68] sm:$0xff]
    %v229 = vld [vmem:[#allocation3 + $0x70] sm:$0xff]
    %v230 = vld [vmem:[#allocation3 + $0x78] sm:$0xff]
    %v231 = vld [vmem:[%s1] sm:$0xff]
    %v232 = vld [vmem:[#allocation2] sm:$0xff]
    %233 = vmatprep.subr.mxu0 0.0
    %234 = vmatpush1.msra.mxu0 %v230
    %235 = vmatprep.subr.mxu0 0.0
    %236 = vmatpush1.msra.mxu0 %v229
    %237 = vmatprep.subr.mxu0 0.0
    %238 = vmatpush1.msra.mxu0 %v228
    %239 = vmatprep.subr.mxu0 0.0
    %240 = vmatpush1.msra.mxu0 %v227
    %241 = vmatprep.subr.mxu0 0.0
    %242 = vmatpush1.msra.mxu0 %v226
    %243 = vmatprep.subr.mxu0 0.0
    %244 = vmatpush1.msra.mxu0 %v225
    %245 = vmatprep.subr.mxu0 0.0
    %246 = vmatpush1.msra.mxu0 %v224
    %247 = vmatprep.subr.mxu0 0.0
    %248 = vmatpush1.msra.mxu0 %v223
    %249 = vmatprep.subr.mxu0 0.0
    %250 = vmatpush1.msra.mxu0 %v222
    %251 = vmatprep.subr.mxu0 0.0
    %252 = vmatpush1.msra.mxu0 %v221
    %253 = vmatprep.subr.mxu0 0.0
    %254 = vmatpush1.msra.mxu0 %v220
    %255 = vmatprep.subr.mxu0 0.0
    %256 = vmatpush1.msra.mxu0 %v219
    %257 = vmatprep.subr.mxu0 0.0
    %258 = vmatpush1.msra.mxu0 %v218
    %259 = vmatprep.subr.mxu0 0.0
    %260 = vmatpush1.msra.mxu0 %v217
    %261 = vmatprep.subr.mxu0 0.0
    %262 = vmatpush1.msra.mxu0 %v216
    %263 = vmatprep.subr.mxu0 0.0
    %264 = vmatpush1.msra.mxu0 %v215
    %265 = vmatprep.subr.mxu0 0.0
    %266 = vmatpush2.msra.mxu0 0.0
    %267 = vmatprep.subr.mxu0 0.0
    %268 = vmatpush2.msra.mxu0 0.0
    %269 = vmatprep.subr.mxu0 0.0
    %270 = vmatpush2.msra.mxu0 0.0
    %271 = vmatprep.subr.mxu0 0.0
    %272 = vmatpush2.msra.mxu0 0.0
    %273 = vmatprep.subr.mxu0 0.0
    %274 = vmatpush2.msra.mxu0 0.0
    %275 = vmatprep.subr.mxu0 0.0
    %276 = vmatpush2.msra.mxu0 0.0
    %277 = vmatprep.subr.mxu0 0.0
    %278 = vmatpush2.msra.mxu0 0.0
    %279 = vmatprep.subr.mxu0 0.0
    %280 = vmatpush2.msra.mxu0 0.0
    %281 = vmatprep.subr.mxu0 0.0
    %282 = vmatpush2.msra.mxu0 0.0
    %283 = vmatprep.subr.mxu0 0.0
    %284 = vmatpush2.msra.mxu0 0.0
    %285 = vmatprep.subr.mxu0 0.0
    %286 = vmatpush2.msra.mxu0 0.0
    %287 = vmatprep.subr.mxu0 0.0
    %288 = vmatpush2.msra.mxu0 0.0
    %289 = vmatprep.subr.mxu0 0.0
    %290 = vmatpush2.msra.mxu0 0.0
    %291 = vmatprep.subr.mxu0 0.0
    %292 = vmatpush2.msra.mxu0 0.0
    %293 = vmatprep.subr.mxu0 0.0
    %294 = vmatpush2.msra.mxu0 0.0
    %295 = vmatprep.subr.mxu0 0.0
    %296 = vmatpush2.msra.mxu0 0.0
    %297 = vmatprep.mubr.f32.mxu0 0.0
    %298 = vmatmul.mubr.f32.gmra.mxu0 %v231
    %v299 = vpop.f32.mrf.mxu0
    %v300 = vadd.f32 0.0, %v299
    %v301 = vpop.f32.mrf.mxu0
    %302 = vdwg.mxu0
    %v303 = vadd.f32 %v232, %v300
    %v304 = vtanh.pop %v303
    %v305 = vld [vmem:[#allocation2 + $0x8] sm:$0xff]
    %306 = vmatprep.subr.mxu0 0.0
    %307 = vmatpush1.msra.mxu0 %v230
    %308 = vmatprep.subr.mxu0 0.0
    %309 = vmatpush1.msra.mxu0 %v229
    %310 = vmatprep.subr.mxu0 0.0
    %311 = vmatpush1.msra.mxu0 %v228
    %312 = vmatprep.subr.mxu0 0.0
    %313 = vmatpush1.msra.mxu0 %v227
    %314 = vmatprep.subr.mxu0 0.0
    %315 = vmatpush1.msra.mxu0 %v226
    %316 = vmatprep.subr.mxu0 0.0
    %317 = vmatpush1.msra.mxu0 %v225
    %318 = vmatprep.subr.mxu0 0.0
    %319 = vmatpush1.msra.mxu0 %v224
    %320 = vmatprep.subr.mxu0 0.0
    %321 = vmatpush1.msra.mxu0 %v223
    %322 = vmatprep.subr.mxu0 0.0
    %323 = vmatpush1.msra.mxu0 %v222
    %324 = vmatprep.subr.mxu0 0.0
    %325 = vmatpush1.msra.mxu0 %v221
    %326 = vmatprep.subr.mxu0 0.0
    %327 = vmatpush1.msra.mxu0 %v220
    %328 = vmatprep.subr.mxu0 0.0
    %329 = vmatpush1.msra.mxu0 %v219
    %330 = vmatprep.subr.mxu0 0.0
    %331 = vmatpush1.msra.mxu0 %v218
    %332 = vmatprep.subr.mxu0 0.0
    %333 = vmatpush1.msra.mxu0 %v217
    %334 = vmatprep.subr.mxu0 0.0
    %335 = vmatpush1.msra.mxu0 %v216
    %336 = vmatprep.subr.mxu0 0.0
    %337 = vmatpush1.msra.mxu0 %v215
    %338 = vmatprep.subr.mxu0 0.0
    %339 = vmatpush2.msra.mxu0 0.0
    %340 = vmatprep.subr.mxu0 0.0
    %341 = vmatpush2.msra.mxu0 0.0
    %342 = vmatprep.subr.mxu0 0.0
    %343 = vmatpush2.msra.mxu0 0.0
    %344 = vmatprep.subr.mxu0 0.0
    %345 = vmatpush2.msra.mxu0 0.0
    %346 = vmatprep.subr.mxu0 0.0
    %347 = vmatpush2.msra.mxu0 0.0
    %348 = vmatprep.subr.mxu0 0.0
    %349 = vmatpush2.msra.mxu0 0.0
    %350 = vmatprep.subr.mxu0 0.0
    %351 = vmatpush2.msra.mxu0 0.0
    %352 = vmatprep.subr.mxu0 0.0
    %353 = vmatpush2.msra.mxu0 0.0
    %354 = vmatprep.subr.mxu0 0.0
    %355 = vmatpush2.msra.mxu0 0.0
    %356 = vmatprep.subr.mxu0 0.0
    %357 = vmatpush2.msra.mxu0 0.0
    %358 = vmatprep.subr.mxu0 0.0
    %359 = vmatpush2.msra.mxu0 0.0
    %360 = vmatprep.subr.mxu0 0.0
    %361 = vmatpush2.msra.mxu0 0.0
    %362 = vmatprep.subr.mxu0 0.0
    %363 = vmatpush2.msra.mxu0 0.0
    %364 = vmatprep.subr.mxu0 0.0
    %365 = vmatpush2.msra.mxu0 0.0
    %366 = vmatprep.subr.mxu0 0.0
    %367 = vmatpush2.msra.mxu0 0.0
    %368 = vmatprep.subr.mxu0 0.0
    %369 = vmatpush2.msra.mxu0 0.0
    %370 = vmatprep.mubr.f32.mxu0 0.0
    %371 = vmatmul.mubr.f32.gmra.mxu0 %v304
    %v372 = vpop.f32.mrf.mxu0
    %v373 = vadd.f32 0.0, %v372
    %v374 = vpop.f32.mrf.mxu0
    %375 = vdwg.mxu0
    %v376 = vadd.f32 %v305, %v373
    %v377 = vtanh.pop %v376
    %v378 = vld [vmem:[#allocation2 + $0x10] sm:$0xff]
    %379 = vmatprep.subr.mxu0 0.0
    %380 = vmatpush1.msra.mxu0 %v230
    %381 = vmatprep.subr.mxu0 0.0
    %382 = vmatpush1.msra.mxu0 %v229
    %383 = vmatprep.subr.mxu0 0.0
    %384 = vmatpush1.msra.mxu0 %v228
    %385 = vmatprep.subr.mxu0 0.0
    %386 = vmatpush1.msra.mxu0 %v227
    %387 = vmatprep.subr.mxu0 0.0
    %388 = vmatpush1.msra.mxu0 %v226
    %389 = vmatprep.subr.mxu0 0.0
    %390 = vmatpush1.msra.mxu0 %v225
    %391 = vmatprep.subr.mxu0 0.0
    %392 = vmatpush1.msra.mxu0 %v224
    %393 = vmatprep.subr.mxu0 0.0
    %394 = vmatpush1.msra.mxu0 %v223
    %395 = vmatprep.subr.mxu0 0.0
    %396 = vmatpush1.msra.mxu0 %v222
    %397 = vmatprep.subr.mxu0 0.0
    %398 = vmatpush1.msra.mxu0 %v221
    %399 = vmatprep.subr.mxu0 0.0
    %400 = vmatpush1.msra.mxu0 %v220
    %401 = vmatprep.subr.mxu0 0.0
    %402 = vmatpush1.msra.mxu0 %v219
    %403 = vmatprep.subr.mxu0 0.0
    %404 = vmatpush1.msra.mxu0 %v218
    %405 = vmatprep.subr.mxu0 0.0
    %406 = vmatpush1.msra.mxu0 %v217
    %407 = vmatprep.subr.mxu0 0.0
    %408 = vmatpush1.msra.mxu0 %v216
    %409 = vmatprep.subr.mxu0 0.0
    %410 = vmatpush1.msra.mxu0 %v215
    %411 = vmatprep.subr.mxu0 0.0
    %412 = vmatpush2.msra.mxu0 0.0
    %413 = vmatprep.subr.mxu0 0.0
    %414 = vmatpush2.msra.mxu0 0.0
    %415 = vmatprep.subr.mxu0 0.0
    %416 = vmatpush2.msra.mxu0 0.0
    %417 = vmatprep.subr.mxu0 0.0
    %418 = vmatpush2.msra.mxu0 0.0
    %419 = vmatprep.subr.mxu0 0.0
    %420 = vmatpush2.msra.mxu0 0.0
    %421 = vmatprep.subr.mxu0 0.0
    %422 = vmatpush2.msra.mxu0 0.0
    %423 = vmatprep.subr.mxu0 0.0
    %424 = vmatpush2.msra.mxu0 0.0
    %425 = vmatprep.subr.mxu0 0.0
    %426 = vmatpush2.msra.mxu0 0.0
    %427 = vmatprep.subr.mxu0 0.0
    %428 = vmatpush2.msra.mxu0 0.0
    %429 = vmatprep.subr.mxu0 0.0
    %430 = vmatpush2.msra.mxu0 0.0
    %431 = vmatprep.subr.mxu0 0.0
    %432 = vmatpush2.msra.mxu0 0.0
    %433 = vmatprep.subr.mxu0 0.0
    %434 = vmatpush2.msra.mxu0 0.0
    %435 = vmatprep.subr.mxu0 0.0
    %436 = vmatpush2.msra.mxu0 0.0
    %437 = vmatprep.subr.mxu0 0.0
    %438 = vmatpush2.msra.mxu0 0.0
    %439 = vmatprep.subr.mxu0 0.0
    %440 = vmatpush2.msra.mxu0 0.0
    %441 = vmatprep.subr.mxu0 0.0
    %442 = vmatpush2.msra.mxu0 0.0
    %443 = vmatprep.mubr.f32.mxu0 0.0
    %444 = vmatmul.mubr.f32.gmra.mxu0 %v377
    %v445 = vpop.f32.mrf.mxu0
    %v446 = vadd.f32 0.0, %v445
    %v447 = vpop.f32.mrf.mxu0
    %448 = vdwg.mxu0
    %v449 = vadd.f32 %v378, %v446
    %v450 = vtanh.pop %v449
    %v451 = vld [vmem:[#allocation2 + $0x18] sm:$0xff]
    %452 = vmatprep.subr.mxu0 0.0
    %453 = vmatpush1.msra.mxu0 %v230
    %454 = vmatprep.subr.mxu0 0.0
    %455 = vmatpush1.msra.mxu0 %v229
    %456 = vmatprep.subr.mxu0 0.0
    %457 = vmatpush1.msra.mxu0 %v228
    %458 = vmatprep.subr.mxu0 0.0
    %459 = vmatpush1.msra.mxu0 %v227
    %460 = vmatprep.subr.mxu0 0.0
    %461 = vmatpush1.msra.mxu0 %v226
    %462 = vmatprep.subr.mxu0 0.0
    %463 = vmatpush1.msra.mxu0 %v225
    %464 = vmatprep.subr.mxu0 0.0
    %465 = vmatpush1.msra.mxu0 %v224
    %466 = vmatprep.subr.mxu0 0.0
    %467 = vmatpush1.msra.mxu0 %v223
    %468 = vmatprep.subr.mxu0 0.0
    %469 = vmatpush1.msra.mxu0 %v222
    %470 = vmatprep.subr.mxu0 0.0
    %471 = vmatpush1.msra.mxu0 %v221
    %472 = vmatprep.subr.mxu0 0.0
    %473 = vmatpush1.msra.mxu0 %v220
    %474 = vmatprep.subr.mxu0 0.0
    %475 = vmatpush1.msra.mxu0 %v219
    %476 = vmatprep.subr.mxu0 0.0
    %477 = vmatpush1.msra.mxu0 %v218
    %478 = vmatprep.subr.mxu0 0.0
    %479 = vmatpush1.msra.mxu0 %v217
    %480 = vmatprep.subr.mxu0 0.0
    %481 = vmatpush1.msra.mxu0 %v216
    %482 = vmatprep.subr.mxu0 0.0
    %483 = vmatpush1.msra.mxu0 %v215
    %484 = vmatprep.subr.mxu0 0.0
    %485 = vmatpush2.msra.mxu0 0.0
    %486 = vmatprep.subr.mxu0 0.0
    %487 = vmatpush2.msra.mxu0 0.0
    %488 = vmatprep.subr.mxu0 0.0
    %489 = vmatpush2.msra.mxu0 0.0
    %490 = vmatprep.subr.mxu0 0.0
    %491 = vmatpush2.msra.mxu0 0.0
    %492 = vmatprep.subr.mxu0 0.0
    %493 = vmatpush2.msra.mxu0 0.0
    %494 = vmatprep.subr.mxu0 0.0
    %495 = vmatpush2.msra.mxu0 0.0
    %496 = vmatprep.subr.mxu0 0.0
    %497 = vmatpush2.msra.mxu0 0.0
    %498 = vmatprep.subr.mxu0 0.0
    %499 = vmatpush2.msra.mxu0 0.0
    %500 = vmatprep.subr.mxu0 0.0
    %501 = vmatpush2.msra.mxu0 0.0
    %502 = vmatprep.subr.mxu0 0.0
    %503 = vmatpush2.msra.mxu0 0.0
    %504 = vmatprep.subr.mxu0 0.0
    %505 = vmatpush2.msra.mxu0 0.0
    %506 = vmatprep.subr.mxu0 0.0
    %507 = vmatpush2.msra.mxu0 0.0
    %508 = vmatprep.subr.mxu0 0.0
    %509 = vmatpush2.msra.mxu0 0.0
    %510 = vmatprep.subr.mxu0 0.0
    %511 = vmatpush2.msra.mxu0 0.0
    %512 = vmatprep.subr.mxu0 0.0
    %513 = vmatpush2.msra.mxu0 0.0
    %514 = vmatprep.subr.mxu0 0.0
    %515 = vmatpush2.msra.mxu0 0.0
    %516 = vmatprep.mubr.f32.mxu0 0.0
    %517 = vmatmul.mubr.f32.gmra.mxu0 %v450
    %v518 = vpop.f32.mrf.mxu0
    %v519 = vadd.f32 0.0, %v518
    %v520 = vpop.f32.mrf.mxu0
    %521 = vdwg.mxu0
    %v522 = vadd.f32 %v451, %v519
    %v523 = vtanh.pop %v522
    %v524 = vld [vmem:[#allocation2 + $0x20] sm:$0xff]
    %525 = vmatprep.subr.mxu0 0.0
    %526 = vmatpush1.msra.mxu0 %v230
    %527 = vmatprep.subr.mxu0 0.0
    %528 = vmatpush1.msra.mxu0 %v229
    %529 = vmatprep.subr.mxu0 0.0
    %530 = vmatpush1.msra.mxu0 %v228
    %531 = vmatprep.subr.mxu0 0.0
    %532 = vmatpush1.msra.mxu0 %v227
    %533 = vmatprep.subr.mxu0 0.0
    %534 = vmatpush1.msra.mxu0 %v226
    %535 = vmatprep.subr.mxu0 0.0
    %536 = vmatpush1.msra.mxu0 %v225
    %537 = vmatprep.subr.mxu0 0.0
    %538 = vmatpush1.msra.mxu0 %v224
    %539 = vmatprep.subr.mxu0 0.0
    %540 = vmatpush1.msra.mxu0 %v223
    %541 = vmatprep.subr.mxu0 0.0
    %542 = vmatpush1.msra.mxu0 %v222
    %543 = vmatprep.subr.mxu0 0.0
    %544 = vmatpush1.msra.mxu0 %v221
    %545 = vmatprep.subr.mxu0 0.0
    %546 = vmatpush1.msra.mxu0 %v220
    %547 = vmatprep.subr.mxu0 0.0
    %548 = vmatpush1.msra.mxu0 %v219
    %549 = vmatprep.subr.mxu0 0.0
    %550 = vmatpush1.msra.mxu0 %v218
    %551 = vmatprep.subr.mxu0 0.0
    %552 = vmatpush1.msra.mxu0 %v217
    %553 = vmatprep.subr.mxu0 0.0
    %554 = vmatpush1.msra.mxu0 %v216
    %555 = vmatprep.subr.mxu0 0.0
    %556 = vmatpush1.msra.mxu0 %v215
    %557 = vmatprep.subr.mxu0 0.0
    %558 = vmatpush2.msra.mxu0 0.0
    %559 = vmatprep.subr.mxu0 0.0
    %560 = vmatpush2.msra.mxu0 0.0
    %561 = vmatprep.subr.mxu0 0.0
    %562 = vmatpush2.msra.mxu0 0.0
    %563 = vmatprep.subr.mxu0 0.0
    %564 = vmatpush2.msra.mxu0 0.0
    %565 = vmatprep.subr.mxu0 0.0
    %566 = vmatpush2.msra.mxu0 0.0
    %567 = vmatprep.subr.mxu0 0.0
    %568 = vmatpush2.msra.mxu0 0.0
    %569 = vmatprep.subr.mxu0 0.0
    %570 = vmatpush2.msra.mxu0 0.0
    %571 = vmatprep.subr.mxu0 0.0
    %572 = vmatpush2.msra.mxu0 0.0
    %573 = vmatprep.subr.mxu0 0.0
    %574 = vmatpush2.msra.mxu0 0.0
    %575 = vmatprep.subr.mxu0 0.0
    %576 = vmatpush2.msra.mxu0 0.0
    %577 = vmatprep.subr.mxu0 0.0
    %578 = vmatpush2.msra.mxu0 0.0
    %579 = vmatprep.subr.mxu0 0.0
    %580 = vmatpush2.msra.mxu0 0.0
    %581 = vmatprep.subr.mxu0 0.0
    %582 = vmatpush2.msra.mxu0 0.0
    %583 = vmatprep.subr.mxu0 0.0
    %584 = vmatpush2.msra.mxu0 0.0
    %585 = vmatprep.subr.mxu0 0.0
    %586 = vmatpush2.msra.mxu0 0.0
    %587 = vmatprep.subr.mxu0 0.0
    %588 = vmatpush2.msra.mxu0 0.0
    %589 = vmatprep.mubr.f32.mxu0 0.0
    %590 = vmatmul.mubr.f32.gmra.mxu0 %v523
    %v591 = vpop.f32.mrf.mxu0
    %v592 = vadd.f32 0.0, %v591
    %v593 = vpop.f32.mrf.mxu0
    %594 = vdwg.mxu0
    %v595 = vadd.f32 %v524, %v592
    %v596 = vtanh.pop %v595
    %v597 = vld [vmem:[#allocation2 + $0x28] sm:$0xff]
    %598 = vmatprep.subr.mxu0 0.0
    %599 = vmatpush1.msra.mxu0 %v230
    %600 = vmatprep.subr.mxu0 0.0
    %601 = vmatpush1.msra.mxu0 %v229
    %602 = vmatprep.subr.mxu0 0.0
    %603 = vmatpush1.msra.mxu0 %v228
    %604 = vmatprep.subr.mxu0 0.0
    %605 = vmatpush1.msra.mxu0 %v227
    %606 = vmatprep.subr.mxu0 0.0
    %607 = vmatpush1.msra.mxu0 %v226
    %608 = vmatprep.subr.mxu0 0.0
    %609 = vmatpush1.msra.mxu0 %v225
    %610 = vmatprep.subr.mxu0 0.0
    %611 = vmatpush1.msra.mxu0 %v224
    %612 = vmatprep.subr.mxu0 0.0
    %613 = vmatpush1.msra.mxu0 %v223
    %614 = vmatprep.subr.mxu0 0.0
    %615 = vmatpush1.msra.mxu0 %v222
    %616 = vmatprep.subr.mxu0 0.0
    %617 = vmatpush1.msra.mxu0 %v221
    %618 = vmatprep.subr.mxu0 0.0
    %619 = vmatpush1.msra.mxu0 %v220
    %620 = vmatprep.subr.mxu0 0.0
    %621 = vmatpush1.msra.mxu0 %v219
    %622 = vmatprep.subr.mxu0 0.0
    %623 = vmatpush1.msra.mxu0 %v218
    %624 = vmatprep.subr.mxu0 0.0
    %625 = vmatpush1.msra.mxu0 %v217
    %626 = vmatprep.subr.mxu0 0.0
    %627 = vmatpush1.msra.mxu0 %v216
    %628 = vmatprep.subr.mxu0 0.0
    %629 = vmatpush1.msra.mxu0 %v215
    %630 = vmatprep.subr.mxu0 0.0
    %631 = vmatpush2.msra.mxu0 0.0
    %632 = vmatprep.subr.mxu0 0.0
    %633 = vmatpush2.msra.mxu0 0.0
    %634 = vmatprep.subr.mxu0 0.0
    %635 = vmatpush2.msra.mxu0 0.0
    %636 = vmatprep.subr.mxu0 0.0
    %637 = vmatpush2.msra.mxu0 0.0
    %638 = vmatprep.subr.mxu0 0.0
    %639 = vmatpush2.msra.mxu0 0.0
    %640 = vmatprep.subr.mxu0 0.0
    %641 = vmatpush2.msra.mxu0 0.0
    %642 = vmatprep.subr.mxu0 0.0
    %643 = vmatpush2.msra.mxu0 0.0
    %644 = vmatprep.subr.mxu0 0.0
    %645 = vmatpush2.msra.mxu0 0.0
    %646 = vmatprep.subr.mxu0 0.0
    %647 = vmatpush2.msra.mxu0 0.0
    %648 = vmatprep.subr.mxu0 0.0
    %649 = vmatpush2.msra.mxu0 0.0
    %650 = vmatprep.subr.mxu0 0.0
    %651 = vmatpush2.msra.mxu0 0.0
    %652 = vmatprep.subr.mxu0 0.0
    %653 = vmatpush2.msra.mxu0 0.0
    %654 = vmatprep.subr.mxu0 0.0
    %655 = vmatpush2.msra.mxu0 0.0
    %656 = vmatprep.subr.mxu0 0.0
    %657 = vmatpush2.msra.mxu0 0.0
    %658 = vmatprep.subr.mxu0 0.0
    %659 = vmatpush2.msra.mxu0 0.0
    %660 = vmatprep.subr.mxu0 0.0
    %661 = vmatpush2.msra.mxu0 0.0
    %662 = vmatprep.mubr.f32.mxu0 0.0
    %663 = vmatmul.mubr.f32.gmra.mxu0 %v596
    %v664 = vpop.f32.mrf.mxu0
    %v665 = vadd.f32 0.0, %v664
    %v666 = vpop.f32.mrf.mxu0
    %667 = vdwg.mxu0
    %v668 = vadd.f32 %v597, %v665
    %v669 = vtanh.pop %v668
    %v670 = vld [vmem:[#allocation2 + $0x30] sm:$0xff]
    %671 = vmatprep.subr.mxu0 0.0
    %672 = vmatpush1.msra.mxu0 %v230
    %673 = vmatprep.subr.mxu0 0.0
    %674 = vmatpush1.msra.mxu0 %v229
    %675 = vmatprep.subr.mxu0 0.0
    %676 = vmatpush1.msra.mxu0 %v228
    %677 = vmatprep.subr.mxu0 0.0
    %678 = vmatpush1.msra.mxu0 %v227
    %679 = vmatprep.subr.mxu0 0.0
    %680 = vmatpush1.msra.mxu0 %v226
    %681 = vmatprep.subr.mxu0 0.0
    %682 = vmatpush1.msra.mxu0 %v225
    %683 = vmatprep.subr.mxu0 0.0
    %684 = vmatpush1.msra.mxu0 %v224
    %685 = vmatprep.subr.mxu0 0.0
    %686 = vmatpush1.msra.mxu0 %v223
    %687 = vmatprep.subr.mxu0 0.0
    %688 = vmatpush1.msra.mxu0 %v222
    %689 = vmatprep.subr.mxu0 0.0
    %690 = vmatpush1.msra.mxu0 %v221
    %691 = vmatprep.subr.mxu0 0.0
    %692 = vmatpush1.msra.mxu0 %v220
    %693 = vmatprep.subr.mxu0 0.0
    %694 = vmatpush1.msra.mxu0 %v219
    %695 = vmatprep.subr.mxu0 0.0
    %696 = vmatpush1.msra.mxu0 %v218
    %697 = vmatprep.subr.mxu0 0.0
    %698 = vmatpush1.msra.mxu0 %v217
    %699 = vmatprep.subr.mxu0 0.0
    %700 = vmatpush1.msra.mxu0 %v216
    %701 = vmatprep.subr.mxu0 0.0
    %702 = vmatpush1.msra.mxu0 %v215
    %703 = vmatprep.subr.mxu0 0.0
    %704 = vmatpush2.msra.mxu0 0.0
    %705 = vmatprep.subr.mxu0 0.0
    %706 = vmatpush2.msra.mxu0 0.0
    %707 = vmatprep.subr.mxu0 0.0
    %708 = vmatpush2.msra.mxu0 0.0
    %709 = vmatprep.subr.mxu0 0.0
    %710 = vmatpush2.msra.mxu0 0.0
    %711 = vmatprep.subr.mxu0 0.0
    %712 = vmatpush2.msra.mxu0 0.0
    %713 = vmatprep.subr.mxu0 0.0
    %714 = vmatpush2.msra.mxu0 0.0
    %715 = vmatprep.subr.mxu0 0.0
    %716 = vmatpush2.msra.mxu0 0.0
    %717 = vmatprep.subr.mxu0 0.0
    %718 = vmatpush2.msra.mxu0 0.0
    %719 = vmatprep.subr.mxu0 0.0
    %720 = vmatpush2.msra.mxu0 0.0
    %721 = vmatprep.subr.mxu0 0.0
    %722 = vmatpush2.msra.mxu0 0.0
    %723 = vmatprep.subr.mxu0 0.0
    %724 = vmatpush2.msra.mxu0 0.0
    %725 = vmatprep.subr.mxu0 0.0
    %726 = vmatpush2.msra.mxu0 0.0
    %727 = vmatprep.subr.mxu0 0.0
    %728 = vmatpush2.msra.mxu0 0.0
    %729 = vmatprep.subr.mxu0 0.0
    %730 = vmatpush2.msra.mxu0 0.0
    %731 = vmatprep.subr.mxu0 0.0
    %732 = vmatpush2.msra.mxu0 0.0
    %733 = vmatprep.subr.mxu0 0.0
    %734 = vmatpush2.msra.mxu0 0.0
    %735 = vmatprep.mubr.f32.mxu0 0.0
    %736 = vmatmul.mubr.f32.gmra.mxu0 %v669
    %v737 = vpop.f32.mrf.mxu0
    %v738 = vadd.f32 0.0, %v737
    %v739 = vpop.f32.mrf.mxu0
    %740 = vdwg.mxu0
    %v741 = vadd.f32 %v670, %v738
    %v742 = vtanh.pop %v741
    %v743 = vld [vmem:[#allocation2 + $0x38] sm:$0xff]
    %744 = vmatprep.subr.mxu0 0.0
    %745 = vmatpush1.msra.mxu0 %v230
    %746 = vmatprep.subr.mxu0 0.0
    %747 = vmatpush1.msra.mxu0 %v229
    %748 = vmatprep.subr.mxu0 0.0
    %749 = vmatpush1.msra.mxu0 %v228
    %750 = vmatprep.subr.mxu0 0.0
    %751 = vmatpush1.msra.mxu0 %v227
    %752 = vmatprep.subr.mxu0 0.0
    %753 = vmatpush1.msra.mxu0 %v226
    %754 = vmatprep.subr.mxu0 0.0
    %755 = vmatpush1.msra.mxu0 %v225
    %756 = vmatprep.subr.mxu0 0.0
    %757 = vmatpush1.msra.mxu0 %v224
    %758 = vmatprep.subr.mxu0 0.0
    %759 = vmatpush1.msra.mxu0 %v223
    %760 = vmatprep.subr.mxu0 0.0
    %761 = vmatpush1.msra.mxu0 %v222
    %762 = vmatprep.subr.mxu0 0.0
    %763 = vmatpush1.msra.mxu0 %v221
    %764 = vmatprep.subr.mxu0 0.0
    %765 = vmatpush1.msra.mxu0 %v220
    %766 = vmatprep.subr.mxu0 0.0
    %767 = vmatpush1.msra.mxu0 %v219
    %768 = vmatprep.subr.mxu0 0.0
    %769 = vmatpush1.msra.mxu0 %v218
    %770 = vmatprep.subr.mxu0 0.0
    %771 = vmatpush1.msra.mxu0 %v217
    %772 = vmatprep.subr.mxu0 0.0
    %773 = vmatpush1.msra.mxu0 %v216
    %774 = vmatprep.subr.mxu0 0.0
    %775 = vmatpush1.msra.mxu0 %v215
    %776 = vmatprep.subr.mxu0 0.0
    %777 = vmatpush2.msra.mxu0 0.0
    %778 = vmatprep.subr.mxu0 0.0
    %779 = vmatpush2.msra.mxu0 0.0
    %780 = vmatprep.subr.mxu0 0.0
    %781 = vmatpush2.msra.mxu0 0.0
    %782 = vmatprep.subr.mxu0 0.0
    %783 = vmatpush2.msra.mxu0 0.0
    %784 = vmatprep.subr.mxu0 0.0
    %785 = vmatpush2.msra.mxu0 0.0
    %786 = vmatprep.subr.mxu0 0.0
    %787 = vmatpush2.msra.mxu0 0.0
    %788 = vmatprep.subr.mxu0 0.0
    %789 = vmatpush2.msra.mxu0 0.0
    %790 = vmatprep.subr.mxu0 0.0
    %791 = vmatpush2.msra.mxu0 0.0
    %792 = vmatprep.subr.mxu0 0.0
    %793 = vmatpush2.msra.mxu0 0.0
    %794 = vmatprep.subr.mxu0 0.0
    %795 = vmatpush2.msra.mxu0 0.0
    %796 = vmatprep.subr.mxu0 0.0
    %797 = vmatpush2.msra.mxu0 0.0
    %798 = vmatprep.subr.mxu0 0.0
    %799 = vmatpush2.msra.mxu0 0.0
    %800 = vmatprep.subr.mxu0 0.0
    %801 = vmatpush2.msra.mxu0 0.0
    %802 = vmatprep.subr.mxu0 0.0
    %803 = vmatpush2.msra.mxu0 0.0
    %804 = vmatprep.subr.mxu0 0.0
    %805 = vmatpush2.msra.mxu0 0.0
    %806 = vmatprep.subr.mxu0 0.0
    %807 = vmatpush2.msra.mxu0 0.0
    %808 = vmatprep.mubr.f32.mxu0 0.0
    %809 = vmatmul.mubr.f32.gmra.mxu0 %v742
    %v810 = vpop.f32.mrf.mxu0
    %v811 = vadd.f32 0.0, %v810
    %v812 = vpop.f32.mrf.mxu0
    %813 = vdwg.mxu0
    %v814 = vadd.f32 %v743, %v811
    %v815 = vtanh.pop %v814
    %v816 = vld [vmem:[#allocation6] sm:$0xff]
    %v817 = vld [vmem:[#allocation6 + $0x8] sm:$0xff]
    %v818 = vld [vmem:[#allocation6 + $0x10] sm:$0xff]
    %v819 = vld [vmem:[#allocation6 + $0x18] sm:$0xff]
    %v820 = vld [vmem:[#allocation6 + $0x20] sm:$0xff]
    %v821 = vld [vmem:[#allocation6 + $0x28] sm:$0xff]
    %v822 = vld [vmem:[#allocation6 + $0x30] sm:$0xff]
    %v823 = vld [vmem:[#allocation6 + $0x38] sm:$0xff]
    %v824 = vld [vmem:[#allocation6 + $0x40] sm:$0xff]
    %v825 = vld [vmem:[#allocation6 + $0x48] sm:$0xff]
    %v826 = vld [vmem:[#allocation6 + $0x50] sm:$0xff]
    %v827 = vld [vmem:[#allocation6 + $0x58] sm:$0xff]
    %v828 = vld [vmem:[#allocation6 + $0x60] sm:$0xff]
    %v829 = vld [vmem:[#allocation6 + $0x68] sm:$0xff]
    %v830 = vld [vmem:[#allocation6 + $0x70] sm:$0xff]
    %v831 = vld [vmem:[#allocation6 + $0x78] sm:$0xff]
    %v832 = vld [vmem:[%s6] sm:$0x1]
    %833 = vst [vmem:[#allocation9] sm:$0xff] %v815
    %v835 = vlaneseq
    %v836 = vshrl.u32 %v835, 7
    %v837 = vsub.s32 0, %v836
    %v838 = vrot.slane %v832, %v837
    %840 = vmatprep.subr.mxu0 0.0
    %841 = vmatpush1.msra.mxu0 %v831
    %842 = vmatprep.subr.mxu0 0.0
    %843 = vmatpush1.msra.mxu0 %v830
    %844 = vmatprep.subr.mxu0 0.0
    %845 = vmatpush1.msra.mxu0 %v829
    %846 = vmatprep.subr.mxu0 0.0
    %847 = vmatpush1.msra.mxu0 %v828
    %848 = vmatprep.subr.mxu0 0.0
    %849 = vmatpush1.msra.mxu0 %v827
    %850 = vmatprep.subr.mxu0 0.0
    %851 = vmatpush1.msra.mxu0 %v826
    %852 = vmatprep.subr.mxu0 0.0
    %853 = vmatpush1.msra.mxu0 %v825
    %854 = vmatprep.subr.mxu0 0.0
    %855 = vmatpush1.msra.mxu0 %v824
    %856 = vmatprep.subr.mxu0 0.0
    %857 = vmatpush1.msra.mxu0 %v823
    %858 = vmatprep.subr.mxu0 0.0
    %859 = vmatpush1.msra.mxu0 %v822
    %860 = vmatprep.subr.mxu0 0.0
    %861 = vmatpush1.msra.mxu0 %v821
    %862 = vmatprep.subr.mxu0 0.0
    %863 = vmatpush1.msra.mxu0 %v820
    %864 = vmatprep.subr.mxu0 0.0
    %865 = vmatpush1.msra.mxu0 %v819
    %866 = vmatprep.subr.mxu0 0.0
    %867 = vmatpush1.msra.mxu0 %v818
    %868 = vmatprep.subr.mxu0 0.0
    %869 = vmatpush1.msra.mxu0 %v817
    %870 = vmatprep.subr.mxu0 0.0
    %871 = vmatpush1.msra.mxu0 %v816
    %872 = vmatprep.subr.mxu0 0.0
    %873 = vmatpush2.msra.mxu0 0.0
    %874 = vmatprep.subr.mxu0 0.0
    %875 = vmatpush2.msra.mxu0 0.0
    %876 = vmatprep.subr.mxu0 0.0
    %877 = vmatpush2.msra.mxu0 0.0
    %878 = vmatprep.subr.mxu0 0.0
    %879 = vmatpush2.msra.mxu0 0.0
    %880 = vmatprep.subr.mxu0 0.0
    %881 = vmatpush2.msra.mxu0 0.0
    %882 = vmatprep.subr.mxu0 0.0
    %883 = vmatpush2.msra.mxu0 0.0
    %884 = vmatprep.subr.mxu0 0.0
    %885 = vmatpush2.msra.mxu0 0.0
    %886 = vmatprep.subr.mxu0 0.0
    %887 = vmatpush2.msra.mxu0 0.0
    %888 = vmatprep.subr.mxu0 0.0
    %889 = vmatpush2.msra.mxu0 0.0
    %890 = vmatprep.subr.mxu0 0.0
    %891 = vmatpush2.msra.mxu0 0.0
    %892 = vmatprep.subr.mxu0 0.0
    %893 = vmatpush2.msra.mxu0 0.0
    %894 = vmatprep.subr.mxu0 0.0
    %895 = vmatpush2.msra.mxu0 0.0
    %896 = vmatprep.subr.mxu0 0.0
    %897 = vmatpush2.msra.mxu0 0.0
    %898 = vmatprep.subr.mxu0 0.0
    %899 = vmatpush2.msra.mxu0 0.0
    %900 = vmatprep.subr.mxu0 0.0
    %901 = vmatpush2.msra.mxu0 0.0
    %902 = vmatprep.subr.mxu0 0.0
    %903 = vmatpush2.msra.mxu0 0.0
    %904 = vmatprep.mubr.f32.mxu0 0.0
    %905 = vmatmul.mubr.f32.gmra.mxu0 %v815
    %v906 = vpop.f32.mrf.mxu0
    %v907 = vadd.f32 %v838, %v906
    %v908 = vpop.f32.mrf.mxu0
    %909 = vdwg.mxu0
    %910 = vst [vmem:[#allocation8] sm:$0xff] %v907
    // Predicated region
    $region38: #{tpu_custom_call.1} parent=1 // pred_check
      _
    $region39: #{tpu_custom_call.1} parent=1 // pred_check_branch
      %912 = sbr.rel (0) target = $region41
    $region40: #{tpu_custom_call.1} parent=1 // pred_region
      %s914 = ssub.s32 128, 128
      %915 = vsyncadd [#allocation5], %s914
      %s917 = sshll.u32 [#allocation8], 4
      %s918 = int_to_ptr.vmem [resolvable:$true] %s917
      %920 = dma.vmem_to_hbm [thread:$0]  %s918, 128, %s7, [#allocation5]
    $region41: #{tpu_custom_call.1} parent=1 // pred_fallthru
      _
    // Predicated region
    $region42: #{tpu_custom_call.1} parent=1 // pred_check
      _
    $region43: #{tpu_custom_call.1} parent=1 // pred_check_branch
      %922 = sbr.rel (0) target = $region45
    $region44: #{tpu_custom_call.1} parent=1 // pred_region
      %s924 = ssub.s32 128, 128
      %925 = vsyncadd [#allocation10], %s924
      %s927 = sshll.u32 [#allocation9], 4
      %s928 = int_to_ptr.vmem [resolvable:$true] %s927
      %930 = dma.vmem_to_hbm [thread:$0]  %s928, 128, %s8, [#allocation10]
    $region45: #{tpu_custom_call.1} parent=1 // pred_fallthru
      _
    // Predicated region
    $region46: #{tpu_custom_call.1} parent=1 // pred_check
      _
    $region47: #{tpu_custom_call.1} parent=1 // pred_check_branch
      %932 = sbr.rel (0) target = $region49
    $region48: #{tpu_custom_call.1} parent=1 // pred_region
      %933 = dma.done [#allocation5], 128
    $region49: #{tpu_custom_call.1} parent=1 // pred_fallthru
      _
    // Predicated region
    $region50: #{tpu_custom_call.1} parent=1 // pred_check
      _
    $region51: #{tpu_custom_call.1} parent=1 // pred_check_branch
      %935 = sbr.rel (0) target = $region53
    $region52: #{tpu_custom_call.1} parent=1 // pred_region
      %936 = dma.done [#allocation10], 128
    $region53: #{tpu_custom_call.1} parent=1 // pred_fallthru
      _
    %937 = vsyncpa [#allocation4], 1
    %938 = vsyncpa [#allocation7], 1
    %939 = vsyncpa [#allocation5], 1
    %940 = vsyncpa [#allocation10], 1

</llo_original>
